<compile_context>
chip_gen: v7x
topology: tpu7x:2x2x1
jax: 0.10.0
libtpu: 0.0.40
codegen_flags: <defaults>
</compile_context>

<pallas_src>
import jax
import jax.numpy as jnp
from jax.experimental import pallas as pl
from jax.experimental.pallas import tpu as pltpu


def chas_shift_kernel(x_ref, w1t_ref, b1_ref, w2t_ref, w3t_ref, o_ref):
    # x_ref: (B, C, L)  w1t: (C, c1)  b1: (1, c1)  w2t: (c1, c2)  w3t: (c2, L)
    xb = x_ref[...]                                                   # (B, C, L)
    B, C, L = xb.shape

    # AdaptiveAvgPool3d((1,1,1)) commutes with the k=1 conv -> pool first and
    # never materialize the (c1, B*L) intermediate. Lane reduce.
    xmean = jnp.mean(xb, axis=-1)                                     # (B, C)

    # Conv3d(C -> c1, k=1) with bias on the pooled features. K = C = 3 is a
    # waste of the MXU's systolic rows, so do it as C broadcast FMAs on the VPU.
    pooled = b1_ref[...]                                              # (1, c1)
    for c in range(C):
        pooled = pooled + xmean[:, c:c + 1] * w1t_ref[c:c + 1, :]     # (B, c1)

    # Conv3d(c1 -> c2, k=1, bias=False) + ReLU, lane-major.
    h = jnp.maximum(
        jnp.dot(pooled, w2t_ref[...], preferred_element_type=jnp.float32), 0.0)   # (B, c2)

    # Conv3d(c2 -> out_channel = T*V*M, k=1, bias=False).
    logits = jnp.dot(h, w3t_ref[...], preferred_element_type=jnp.float32)          # (B, L)

    # torch softmax(dim=1) on the (N, L, 1) tensor == softmax over the lane axis.
    m = jnp.max(logits, axis=-1, keepdims=True)
    e = jnp.exp(logits - m)
    inv_denom = pl.reciprocal(jnp.sum(e, axis=-1, keepdims=True), approx=True)     # EUP
    w = e * inv_denom                                                 # (B, L)

    # tx @ softmax -> per-sample weighted channel sum; the expand over
    # (seg, seg_num) and the rearrange back to (T, V, M) are a pure broadcast
    # because seg == 1.
    s = jnp.sum(xb * w[:, None, :], axis=-1, keepdims=True)           # (B, C, 1)

    # x = x - sf  (identity backbone).
    o_ref[...] = xb - s                                               # (B, C, L)


def _pick_block_batch(N, C, L, vmem_budget_bytes=8 << 20):
    """Largest divisor B of N whose padded, double-buffered in+out blocks fit
    the budget, preferring >= 2 grid steps (keeps both v7x TensorCores busy)."""
    c_pad = -(-C // 8) * 8
    l_pad = -(-L // 128) * 128
    per_sample = 2 * 2 * c_pad * l_pad * 4          # in+out, x2 double buffer, f32
    divisors = [b for b in range(1, N + 1) if N % b == 0]
    fitting = [b for b in divisors if b * per_sample <= vmem_budget_bytes] or [1]
    multi_step = [b for b in fitting if N // b >= 2]
    return max(multi_step) if multi_step else max(fitting)


def chas_forward(x, params, block_batch=None):
    """x: (N, C, T, V, M) float32.  Returns (N, C, T, V, M)."""
    N, C, T, V, M = x.shape
    L = T * V * M
    w1, b1, w2, w3 = params
    c1, c2 = w1.shape[0], w2.shape[0]

    if block_batch is None:
        block_batch = _pick_block_batch(N, C, L)
    B = block_batch
    assert N % B == 0, "block_batch must divide N"

    xf = x.reshape(N, C, L)
    # Pre-transpose the k=1 conv weights once so every kernel op is lane-major.
    w1t = w1.T                       # (C, c1)
    b1r = b1.reshape(1, c1)          # (1, c1)
    w2t = w2.T                       # (c1, c2)
    w3t = w3.T                       # (c2, L)

    out_flat = pl.pallas_call(
        chas_shift_kernel,
        out_shape=jax.ShapeDtypeStruct((N, C, L), jnp.float32),
        grid_spec=pltpu.PrefetchScalarGridSpec(
            num_scalar_prefetch=0,
            grid=(N // B,),
            in_specs=[
                pl.BlockSpec((B, C, L), lambda i: (i, 0, 0)),   # x (B samples / step)
                pl.BlockSpec((C, c1), lambda i: (0, 0)),        # W1^T
                pl.BlockSpec((1, c1), lambda i: (0, 0)),        # b1 (row)
                pl.BlockSpec((c1, c2), lambda i: (0, 0)),       # W2^T
                pl.BlockSpec((c2, L), lambda i: (0, 0)),        # W3^T
            ],
            out_specs=pl.BlockSpec((B, C, L), lambda i: (i, 0, 0)),
        ),
        compiler_params=pltpu.CompilerParams(
            dimension_semantics=("parallel",)),
    )(xf, w1t, b1r, w2t, w3t)

    return out_flat.reshape(N, C, T, V, M)


def chas_ref(x, params):
    """Pure-JAX reference of the same eval forward (identity backbone)."""
    N, C, T, V, M = x.shape
    L = T * V * M
    w1, b1, w2, w3 = params
    xf = x.reshape(N, C, L)
    y1 = jnp.einsum('oc,ncl->nol', w1, xf) + b1.reshape(1, -1, 1)     # (N, c1, L)
    pooled = y1.mean(axis=2)                                          # (N, c1)
    h = jnp.maximum(pooled @ w2.T, 0.0)                               # (N, c2)
    logits = h @ w3.T                                                 # (N, L)
    wgt = jax.nn.softmax(logits, axis=1)                              # (N, L)
    s = jnp.einsum('ncl,nl->nc', xf, wgt)                             # (N, C)
    out = xf - s[:, :, None]
    return out.reshape(N, C, T, V, M)


if __name__ == "__main__":
    # Small shapes consistent with the module's conventions. L = T*V*M = 128 so
    # the output slab is lane-dense (the real default L = 64*25*2 = 3200 is
    # also a multiple of 128).
    N, C = 8, 3                 # in_channels = 3
    T, V, M = 8, 8, 2           # num_frame, num_point, num_entity (small)
    c1, c2 = 64, 8              # module defaults
    L = T * V * M               # out_channel of the last 1x1x1 conv

    key = jax.random.PRNGKey(0)
    kx, k1, kb, k2, k3 = jax.random.split(key, 5)

    x = jax.random.normal(kx, (N, C, T, V, M), dtype=jnp.float32)

    # Deterministic synthetic parameters (shapes match the PyTorch Conv3d k=1 weights).
    w1 = 0.1 * jax.random.normal(k1, (c1, C), dtype=jnp.float32)   # Conv3d(C, c1, 1).weight
    b1 = 0.1 * jax.random.normal(kb, (c1,), dtype=jnp.float32)     # Conv3d(C, c1, 1).bias
    w2 = 0.1 * jax.random.normal(k2, (c2, c1), dtype=jnp.float32)  # Conv3d(c1, c2, 1, bias=False)
    w3 = 0.1 * jax.random.normal(k3, (L, c2), dtype=jnp.float32)   # Conv3d(c2, T*V*M, 1, bias=False)
    params = (w1, b1, w2, w3)

    out = chas_forward(x, params)
    out = jax.block_until_ready(out)

    ref = chas_ref(x, params)
    assert out.shape == (N, C, T, V, M)
    # Tolerance loosened slightly: approx reciprocal (EUP) in the softmax and
    # the pool/conv reassociation give ~1e-4-level deviations.
    assert jnp.allclose(out, ref, atol=1e-3, rtol=1e-3), "Pallas kernel mismatch vs reference"

    print("KERNEL_OK")
</pallas_src>

<mosaic_0001>
module attributes {stable_mosaic.version = 11 : i64} {
  func.func @chas_shift_kernel(%arg0: i32, %arg1: memref<4x3x128xf32, #tpu.memory_space<vmem>>, %arg2: memref<3x64xf32, #tpu.memory_space<vmem>>, %arg3: memref<1x64xf32, #tpu.memory_space<vmem>>, %arg4: memref<64x8xf32, #tpu.memory_space<vmem>>, %arg5: memref<8x128xf32, #tpu.memory_space<vmem>>, %arg6: memref<4x3x128xf32, #tpu.memory_space<vmem>>) attributes {dimension_semantics = [#tpu.dimension_semantics<parallel>], iteration_bounds = array<i64: 2>, scalar_prefetch = 0 : i64, scratch_operands = 0 : i64, tpu.core_type = #tpu.core_type<tc>, window_params = [{transform_indices = @transform_0, window_bounds = array<i64: 4, 3, 128>}, {pipeline_mode = #tpu.pipeline_mode<synchronous>, transform_indices = @transform_1, window_bounds = array<i64: 3, 64>}, {pipeline_mode = #tpu.pipeline_mode<synchronous>, transform_indices = @transform_2, window_bounds = array<i64: 1, 64>}, {pipeline_mode = #tpu.pipeline_mode<synchronous>, transform_indices = @transform_3, window_bounds = array<i64: 64, 8>}, {pipeline_mode = #tpu.pipeline_mode<synchronous>, transform_indices = @transform_4, window_bounds = array<i64: 8, 128>}, {transform_indices = @transform_5, window_bounds = array<i64: 4, 3, 128>}]} {
    %c0 = arith.constant 0 : index
    %c0_0 = arith.constant 0 : index
    %c0_1 = arith.constant 0 : index
    %0 = vector.load %arg1[%c0, %c0_0, %c0_1] : memref<4x3x128xf32, #tpu.memory_space<vmem>>, vector<4x3x128xf32>
    %cst = arith.constant dense<0.000000e+00> : vector<4x3xf32>
    %1 = vector.multi_reduction <add>, %0, %cst [2] : vector<4x3x128xf32> to vector<4x3xf32>
    %cst_2 = arith.constant 1.280000e+02 : f32
    %2 = vector.broadcast %cst_2 : f32 to vector<4x3xf32>
    %3 = arith.divf %1, %2 : vector<4x3xf32>
    %c0_3 = arith.constant 0 : index
    %c0_4 = arith.constant 0 : index
    %4 = vector.load %arg3[%c0_3, %c0_4] : memref<1x64xf32, #tpu.memory_space<vmem>>, vector<1x64xf32>
    %5 = vector.extract_strided_slice %3 {offsets = [0, 0], sizes = [4, 1], strides = [1, 1]} : vector<4x3xf32> to vector<4x1xf32>
    %c0_5 = arith.constant 0 : index
    %c0_6 = arith.constant 0 : index
    %6 = vector.load %arg2[%c0_5, %c0_6] : memref<3x64xf32, #tpu.memory_space<vmem>>, vector<1x64xf32>
    %7 = vector.broadcast %5 : vector<4x1xf32> to vector<4x64xf32>
    %8 = vector.broadcast %6 : vector<1x64xf32> to vector<4x64xf32>
    %9 = arith.mulf %7, %8 : vector<4x64xf32>
    %10 = vector.broadcast %4 : vector<1x64xf32> to vector<4x64xf32>
    %11 = arith.addf %10, %9 : vector<4x64xf32>
    %12 = vector.extract_strided_slice %3 {offsets = [0, 1], sizes = [4, 1], strides = [1, 1]} : vector<4x3xf32> to vector<4x1xf32>
    %c1 = arith.constant 1 : index
    %c0_7 = arith.constant 0 : index
    %13 = vector.load %arg2[%c1, %c0_7] : memref<3x64xf32, #tpu.memory_space<vmem>>, vector<1x64xf32>
    %14 = vector.broadcast %12 : vector<4x1xf32> to vector<4x64xf32>
    %15 = vector.broadcast %13 : vector<1x64xf32> to vector<4x64xf32>
    %16 = arith.mulf %14, %15 : vector<4x64xf32>
    %17 = arith.addf %11, %16 : vector<4x64xf32>
    %18 = vector.extract_strided_slice %3 {offsets = [0, 2], sizes = [4, 1], strides = [1, 1]} : vector<4x3xf32> to vector<4x1xf32>
    %c2 = arith.constant 2 : index
    %c0_8 = arith.constant 0 : index
    %19 = vector.load %arg2[%c2, %c0_8] : memref<3x64xf32, #tpu.memory_space<vmem>>, vector<1x64xf32>
    %20 = vector.broadcast %18 : vector<4x1xf32> to vector<4x64xf32>
    %21 = vector.broadcast %19 : vector<1x64xf32> to vector<4x64xf32>
    %22 = arith.mulf %20, %21 : vector<4x64xf32>
    %23 = arith.addf %17, %22 : vector<4x64xf32>
    %c0_9 = arith.constant 0 : index
    %c0_10 = arith.constant 0 : index
    %24 = vector.load %arg4[%c0_9, %c0_10] : memref<64x8xf32, #tpu.memory_space<vmem>>, vector<64x8xf32>
    %cst_11 = arith.constant dense<0.000000e+00> : vector<4x8xf32>
    %25 = tpu.matmul %23, %24, %cst_11 {dimension_numbers = #tpu.dot_dimension_numbers<[1], [0], [0], [1], [0, 0, 1, 1], [], []>} : vector<4x64xf32>, vector<64x8xf32>, vector<4x8xf32> -> vector<4x8xf32>
    %cst_12 = arith.constant 0.000000e+00 : f32
    %26 = vector.broadcast %cst_12 : f32 to vector<4x8xf32>
    %27 = arith.maximumf %25, %26 : vector<4x8xf32>
    %c0_13 = arith.constant 0 : index
    %c0_14 = arith.constant 0 : index
    %28 = vector.load %arg5[%c0_13, %c0_14] : memref<8x128xf32, #tpu.memory_space<vmem>>, vector<8x128xf32>
    %cst_15 = arith.constant dense<0.000000e+00> : vector<4x128xf32>
    %29 = tpu.matmul %27, %28, %cst_15 {dimension_numbers = #tpu.dot_dimension_numbers<[1], [0], [0], [1], [0, 0, 1, 1], [], []>} : vector<4x8xf32>, vector<8x128xf32>, vector<4x128xf32> -> vector<4x128xf32>
    %cst_16 = arith.constant dense<0xFF800000> : vector<4xf32>
    %30 = vector.multi_reduction <maximumf>, %29, %cst_16 [1] : vector<4x128xf32> to vector<4xf32>
    %31 = vector.shape_cast %30 : vector<4xf32> to vector<4x1xf32>
    %32 = vector.broadcast %31 : vector<4x1xf32> to vector<4x128xf32>
    %33 = arith.subf %29, %32 : vector<4x128xf32>
    %34 = math.exp %33 : vector<4x128xf32>
    %cst_17 = arith.constant dense<0.000000e+00> : vector<4xf32>
    %35 = vector.multi_reduction <add>, %34, %cst_17 [1] : vector<4x128xf32> to vector<4xf32>
    %36 = vector.shape_cast %35 : vector<4xf32> to vector<4x1xf32>
    %37 = tpu.reciprocal %36 {approx = true} : vector<4x1xf32> -> vector<4x1xf32>
    %38 = vector.broadcast %37 : vector<4x1xf32> to vector<4x128xf32>
    %39 = arith.mulf %34, %38 : vector<4x128xf32>
    %40 = vector.shape_cast %39 : vector<4x128xf32> to vector<4x1x128xf32>
    %41 = vector.broadcast %40 : vector<4x1x128xf32> to vector<4x3x128xf32>
    %42 = arith.mulf %0, %41 : vector<4x3x128xf32>
    %cst_18 = arith.constant dense<0.000000e+00> : vector<4x3xf32>
    %43 = vector.multi_reduction <add>, %42, %cst_18 [2] : vector<4x3x128xf32> to vector<4x3xf32>
    %44 = vector.shape_cast %43 : vector<4x3xf32> to vector<4x3x1xf32>
    %45 = vector.broadcast %44 : vector<4x3x1xf32> to vector<4x3x128xf32>
    %46 = arith.subf %0, %45 : vector<4x3x128xf32>
    %c0_19 = arith.constant 0 : index
    %c0_20 = arith.constant 0 : index
    %c0_21 = arith.constant 0 : index
    %47 = vector.load %arg6[%c0_19, %c0_20, %c0_21] : memref<4x3x128xf32, #tpu.memory_space<vmem>>, vector<4x3x128xf32>
    tpu.vector_store %arg6[%c0_19, %c0_20, %c0_21], %46 {strides = array<i32>} : memref<4x3x128xf32, #tpu.memory_space<vmem>>, vector<4x3x128xf32>,
    return
  }
  func.func @transform_0(%arg0: i32) -> (i32, i32, i32) {
    %c0_i32 = arith.constant 0 : i32
    %c0_i32_0 = arith.constant 0 : i32
    %c0_i32_1 = arith.constant 0 : i32
    return %arg0, %c0_i32, %c0_i32_0 : i32, i32, i32
  }
  func.func @transform_1(%arg0: i32) -> (i32, i32) {
    %c0_i32 = arith.constant 0 : i32
    %c0_i32_0 = arith.constant 0 : i32
    %c0_i32_1 = arith.constant 0 : i32
    return %c0_i32, %c0_i32_0 : i32, i32
  }
  func.func @transform_2(%arg0: i32) -> (i32, i32) {
    %c0_i32 = arith.constant 0 : i32
    %c0_i32_0 = arith.constant 0 : i32
    %c0_i32_1 = arith.constant 0 : i32
    return %c0_i32, %c0_i32_0 : i32, i32
  }
  func.func @transform_3(%arg0: i32) -> (i32, i32) {
    %c0_i32 = arith.constant 0 : i32
    %c0_i32_0 = arith.constant 0 : i32
    %c0_i32_1 = arith.constant 0 : i32
    return %c0_i32, %c0_i32_0 : i32, i32
  }
  func.func @transform_4(%arg0: i32) -> (i32, i32) {
    %c0_i32 = arith.constant 0 : i32
    %c0_i32_0 = arith.constant 0 : i32
    %c0_i32_1 = arith.constant 0 : i32
    return %c0_i32, %c0_i32_0 : i32, i32
  }
  func.func @transform_5(%arg0: i32) -> (i32, i32, i32) {
    %c0_i32 = arith.constant 0 : i32
    %c0_i32_0 = arith.constant 0 : i32
    %c0_i32_1 = arith.constant 0 : i32
    return %arg0, %c0_i32, %c0_i32_0 : i32, i32, i32
  }
}

</mosaic_0001>

<llo_original>
// kernel: tpu_custom_call.1
$region0: #{tpu_custom_call.1}
  #allocation0 [shape = 'u32[]', space=smem, size = 0x4, offset = 0x4, fixed_abs, tag = 'smem constant byte address 0x4 - core index']
  #allocation1 [shape = 'u32[144,128]{1,0:T(1,128)}', space=vmem, size = 0x12000, scoped, tag = 'internal scratch']
  %s0 = inlined_call_operand.vmem [shape: f32[8,3,128], index: 0, kind: input, shape index: {}]
  %s1 = inlined_call_operand.vmem [shape: f32[3,64], index: 1, kind: input, shape index: {}]
  %s2 = inlined_call_operand.vmem [shape: f32[1,64], index: 2, kind: input, shape index: {}]
  %s3 = inlined_call_operand.vmem [shape: f32[64,8], index: 3, kind: input, shape index: {}]
  %s4 = inlined_call_operand.vmem [shape: f32[8,128], index: 4, kind: input, shape index: {}]
  %s5 = inlined_call_operand.vmem [shape: f32[8,3,128], index: 5, kind: output, shape index: {}]
  %s6 = sld [smem:[#allocation0]]
  $region53: #{tpu_custom_call.1} parent=0
    _
  %s8 = ssub.s32 1, %s6
  %s9 = scalar_select 0, %s8, %s6
  loop: start=0, step=1, limit=4
  $region2: #{tpu_custom_call.1} parent=0 // loop_pre_header
    _
  $region3: #{tpu_custom_call.1} parent=0 // loop_header
    %s11 = sphi 0, %s15
    %p12 = scmp.ge.s32.totalorder %s11, 4
    %s21 = sphi 0, %s23
    %s24 = sphi 0, %s21
    %s25 = sphi 0, %s24
    %s41 = sphi 0, %s25
    %s45 = sphi 0, %s45
    %s47 = sphi 0, %s45
    %s48 = sphi 0, %s47
    %s62 = sphi 0, %s48
    %s66 = sphi 0, %s66
    %s68 = sphi 0, %s66
    %s69 = sphi 0, %s68
    %s83 = sphi 0, %s69
    %s87 = sphi 0, %s87
    %s89 = sphi 0, %s87
    %s90 = sphi 0, %s89
    %s104 = sphi 0, %s90
    %s108 = sphi 0, %s108
    %s110 = sphi 0, %s108
    %s111 = sphi 0, %s110
    %s125 = sphi 0, %s111
    %s131 = sphi 0, %s133
    %s134 = sphi 0, %s131
    %s135 = sphi 0, %s134
    %s151 = sphi 0, %s135
  $region4: #{tpu_custom_call.1} parent=0 // loop_header_branch
    %14 = sbr.rel (%p12) target = $region8
  $region5: #{tpu_custom_call.1} parent=0 // loop_body
    %s16 = ssub.s32 %s11, 1
    %s17 = ssub.s32 %s11, 2
    %s18 = sadd.s32 %s11, 1
    %s19 = ssub.s32 %s11, %s18
    %p20 = scmp.eq.s32.totalorder %s19, 0
    %s22 = sadd.s32 %s21, 1
    %s23 = scalar_select %p20, %s21, %s22
    %p26 = pneg %p20
    %p27 = scmp.eq.s32.totalorder %s11, 1
    %p28 = por %p26, %p27
    %p29 = scmp.ne.s32.totalorder %s21, %s24
    %p30 = scmp.eq.s32.totalorder %s11, 0
    %p31 = por %p29, %p30
    %p32 = scmp.ne.s32.totalorder %s21, %s24
    %p33 = scmp.eq.s32.totalorder %s16, 1
    %p34 = por %p32, %p33
    %p35 = scmp.ne.s32.totalorder %s24, %s25
    %p36 = scmp.eq.s32.totalorder %s16, 0
    %p37 = por %p35, %p36
    %p38 = scmp.ne.s32.totalorder %s24, %s25
    %p39 = scmp.eq.s32.totalorder %s17, 1
    %p40 = por %p38, %p39
    %p42 = scmp.ne.s32.totalorder %s25, %s41
    %p43 = scmp.eq.s32.totalorder %s17, 0
    %p44 = por %p42, %p43
    %s46 = sadd.s32 %s45, 1
    %p49 = scmp.eq.s32.totalorder %s11, 1
    %p50 = scmp.ne.s32.totalorder %s45, %s47
    %p51 = scmp.eq.s32.totalorder %s11, 0
    %p52 = por %p50, %p51
    %p53 = scmp.ne.s32.totalorder %s45, %s47
    %p54 = scmp.eq.s32.totalorder %s16, 1
    %p55 = por %p53, %p54
    %p56 = scmp.ne.s32.totalorder %s47, %s48
    %p57 = scmp.eq.s32.totalorder %s16, 0
    %p58 = por %p56, %p57
    %p59 = scmp.ne.s32.totalorder %s47, %s48
    %p60 = scmp.eq.s32.totalorder %s17, 1
    %p61 = por %p59, %p60
    %p63 = scmp.ne.s32.totalorder %s48, %s62
    %p64 = scmp.eq.s32.totalorder %s17, 0
    %p65 = por %p63, %p64
    %s67 = sadd.s32 %s66, 1
    %p70 = scmp.eq.s32.totalorder %s11, 1
    %p71 = scmp.ne.s32.totalorder %s66, %s68
    %p72 = scmp.eq.s32.totalorder %s11, 0
    %p73 = por %p71, %p72
    %p74 = scmp.ne.s32.totalorder %s66, %s68
    %p75 = scmp.eq.s32.totalorder %s16, 1
    %p76 = por %p74, %p75
    %p77 = scmp.ne.s32.totalorder %s68, %s69
    %p78 = scmp.eq.s32.totalorder %s16, 0
    %p79 = por %p77, %p78
    %p80 = scmp.ne.s32.totalorder %s68, %s69
    %p81 = scmp.eq.s32.totalorder %s17, 1
    %p82 = por %p80, %p81
    %p84 = scmp.ne.s32.totalorder %s69, %s83
    %p85 = scmp.eq.s32.totalorder %s17, 0
    %p86 = por %p84, %p85
    %s88 = sadd.s32 %s87, 1
    %p91 = scmp.eq.s32.totalorder %s11, 1
    %p92 = scmp.ne.s32.totalorder %s87, %s89
    %p93 = scmp.eq.s32.totalorder %s11, 0
    %p94 = por %p92, %p93
    %p95 = scmp.ne.s32.totalorder %s87, %s89
    %p96 = scmp.eq.s32.totalorder %s16, 1
    %p97 = por %p95, %p96
    %p98 = scmp.ne.s32.totalorder %s89, %s90
    %p99 = scmp.eq.s32.totalorder %s16, 0
    %p100 = por %p98, %p99
    %p101 = scmp.ne.s32.totalorder %s89, %s90
    %p102 = scmp.eq.s32.totalorder %s17, 1
    %p103 = por %p101, %p102
    %p105 = scmp.ne.s32.totalorder %s90, %s104
    %p106 = scmp.eq.s32.totalorder %s17, 0
    %p107 = por %p105, %p106
    %s109 = sadd.s32 %s108, 1
    %p112 = scmp.eq.s32.totalorder %s11, 1
    %p113 = scmp.ne.s32.totalorder %s108, %s110
    %p114 = scmp.eq.s32.totalorder %s11, 0
    %p115 = por %p113, %p114
    %p116 = scmp.ne.s32.totalorder %s108, %s110
    %p117 = scmp.eq.s32.totalorder %s16, 1
    %p118 = por %p116, %p117
    %p119 = scmp.ne.s32.totalorder %s110, %s111
    %p120 = scmp.eq.s32.totalorder %s16, 0
    %p121 = por %p119, %p120
    %p122 = scmp.ne.s32.totalorder %s110, %s111
    %p123 = scmp.eq.s32.totalorder %s17, 1
    %p124 = por %p122, %p123
    %p126 = scmp.ne.s32.totalorder %s111, %s125
    %p127 = scmp.eq.s32.totalorder %s17, 0
    %p128 = por %p126, %p127
    %s129 = ssub.s32 %s11, %s18
    %p130 = scmp.eq.s32.totalorder %s129, 0
    %s132 = sadd.s32 %s131, 1
    %s133 = scalar_select %p130, %s131, %s132
    %p136 = pneg %p130
    %p137 = scmp.eq.s32.totalorder %s11, 1
    %p138 = por %p136, %p137
    %p139 = scmp.ne.s32.totalorder %s131, %s134
    %p140 = scmp.eq.s32.totalorder %s11, 0
    %p141 = por %p139, %p140
    %p142 = scmp.ne.s32.totalorder %s131, %s134
    %p143 = scmp.eq.s32.totalorder %s16, 1
    %p144 = por %p142, %p143
    %p145 = scmp.ne.s32.totalorder %s134, %s135
    %p146 = scmp.eq.s32.totalorder %s16, 0
    %p147 = por %p145, %p146
    %p148 = scmp.ne.s32.totalorder %s134, %s135
    %p149 = scmp.eq.s32.totalorder %s17, 1
    %p150 = por %p148, %p149
    %p152 = scmp.ne.s32.totalorder %s135, %s151
    %p153 = scmp.eq.s32.totalorder %s17, 0
    %p154 = por %p152, %p153
    %p155 = scmp.le.s32.totalorder 1, %s11
    %p156 = scmp.lt.s32.totalorder %s11, 3
    %p157 = pnand %p155, %p156
    %p158 = pneg %p157
    // Predicated region
    $region9: #{tpu_custom_call.1} parent=5 // pred_check
      _
    $region10: #{tpu_custom_call.1} parent=5 // pred_check_branch
      %160 = sbr.rel (%p157) target = $region12
    $region11: #{tpu_custom_call.1} parent=5 // pred_region
      %s161 = ssub.s32 %s11, 1
      // Predicated region
      $region13: #{tpu_custom_call.1} parent=11 // pred_check
        %p162 = pneg %p58
      $region14: #{tpu_custom_call.1} parent=11 // pred_check_branch
        %164 = sbr.rel (%p162) target = $region16
      $region15: #{tpu_custom_call.1} parent=11 // pred_region
        _
      $region16: #{tpu_custom_call.1} parent=11 // pred_fallthru
        _
      // Predicated region
      $region17: #{tpu_custom_call.1} parent=11 // pred_check
        %p165 = pneg %p79
      $region18: #{tpu_custom_call.1} parent=11 // pred_check_branch
        %167 = sbr.rel (%p165) target = $region20
      $region19: #{tpu_custom_call.1} parent=11 // pred_region
        _
      $region20: #{tpu_custom_call.1} parent=11 // pred_fallthru
        _
      // Predicated region
      $region21: #{tpu_custom_call.1} parent=11 // pred_check
        %p168 = pneg %p100
      $region22: #{tpu_custom_call.1} parent=11 // pred_check_branch
        %170 = sbr.rel (%p168) target = $region24
      $region23: #{tpu_custom_call.1} parent=11 // pred_region
        _
      $region24: #{tpu_custom_call.1} parent=11 // pred_fallthru
        _
      // Predicated region
      $region25: #{tpu_custom_call.1} parent=11 // pred_check
        %p171 = pneg %p121
      $region26: #{tpu_custom_call.1} parent=11 // pred_check_branch
        %173 = sbr.rel (%p171) target = $region28
      $region27: #{tpu_custom_call.1} parent=11 // pred_region
        _
      $region28: #{tpu_custom_call.1} parent=11 // pred_fallthru
        _
    $region12: #{tpu_custom_call.1} parent=5 // pred_fallthru
      _
    %p174 = scmp.lt.s32.totalorder %s11, 2
    // Predicated region
    $region29: #{tpu_custom_call.1} parent=5 // pred_check
      %p175 = pneg %p174
    $region30: #{tpu_custom_call.1} parent=5 // pred_check_branch
      %177 = sbr.rel (%p175) target = $region32
    $region31: #{tpu_custom_call.1} parent=5 // pred_region
      // Predicated region
      $region33: #{tpu_custom_call.1} parent=31 // pred_check
        %p178 = pneg %p31
      $region34: #{tpu_custom_call.1} parent=31 // pred_check_branch
        %180 = sbr.rel (%p178) target = $region36
      $region35: #{tpu_custom_call.1} parent=31 // pred_region
        %s181 = smul.u32 4, %s11
        %p182 = scmp.lt.s32.totalorder %s181, 7
        %s183 = scalar_select %p182, %s181, 7
        %s184 = smul.addr %s183, 4
        %s185 = scalar_lea.vmem %s0, %s184
        %s186 = smul.u32 4, %s11
      $region36: #{tpu_custom_call.1} parent=31 // pred_fallthru
        _
    $region32: #{tpu_custom_call.1} parent=5 // pred_fallthru
      _
    %p187 = scmp.le.s32.totalorder 1, %s11
    %p188 = scmp.lt.s32.totalorder %s11, 3
    %p189 = pnand %p187, %p188
    %p190 = pneg %p189
    // Predicated region
    $region37: #{tpu_custom_call.1} parent=5 // pred_check
      _
    $region38: #{tpu_custom_call.1} parent=5 // pred_check_branch
      %192 = sbr.rel (%p189) target = $region40
    $region39: #{tpu_custom_call.1} parent=5 // pred_region
      %s193 = ssub.s32 %s11, 1
      %s194 = smul.u32 4, %s16
      %p195 = scmp.lt.s32.totalorder %s194, 7
      %s196 = scalar_select %p195, %s194, 7
      %s197 = smul.addr %s196, 4
      %s198 = scalar_lea.vmem %s0, %s197
      %p199 = pneg %p37
      %p200 = pneg %p34
      %p201 = pneg %p58
      %p202 = pneg %p55
      %p203 = pneg %p79
      %p204 = pneg %p76
      %p205 = pneg %p100
      %p206 = pneg %p97
      %p207 = pneg %p121
      %p208 = pneg %p118
      %p209 = pneg %p147
      %p210 = pneg %p144
      %s211 = smul.u32 4, %s16
      %p212 = scmp.lt.s32.totalorder %s211, 7
      %s213 = scalar_select %p212, %s211, 7
      %s214 = smul.addr %s213, 4
      %s215 = scalar_lea.vmem %s5, %s214
      %s216 = smul.u32 4, %s16
      %p217 = scmp.lt.s32.totalorder %s216, 7
      %s218 = scalar_select %p217, %s216, 7
      %s219 = smul.addr %s218, 4
      %s220 = scalar_lea.vmem %s0, %s219
      %s221 = smul.u32 4, %s16
      %s222 = smul.u32 4, %s16
      %p223 = scmp.lt.s32.totalorder %s222, 7
      %s224 = scalar_select %p223, %s222, 7
      %s225 = smul.addr %s224, 4
      %s226 = scalar_lea.vmem %s5, %s225
      %s227 = smul.u32 4, %s16
      %v228 = vld [vmem:[%s220] sm:$0x7]
      %v229 = vld [vmem:[%s220 + $0x4] sm:$0x7]
      %v230 = vld [vmem:[%s220 + $0x8] sm:$0x7]
      %v231 = vld [vmem:[%s220 + $0xc] sm:$0x7]
      %vm232 = vcmask 1042432
      %v233 = vsel %vm232, %v228, 0.0
      %234 = vadd.xlane.f32.xlu0 %v233
      %v235 = vpop.xlane.xlu0 %234
      %v236 = vsel %vm232, %v229, 0.0
      %237 = vadd.xlane.f32.xlu0 %v236
      %v238 = vpop.xlane.xlu0 %237
      %v239 = vsel %vm232, %v230, 0.0
      %240 = vadd.xlane.f32.xlu0 %v239
      %v241 = vpop.xlane.xlu0 %240
      %v242 = vsel %vm232, %v231, 0.0
      %243 = vadd.xlane.f32.xlu0 %v242
      %v244 = vpop.xlane.xlu0 %243
      %v245 = vrcp.pop 128.0
      %v246 = vmul.f32 %v235, %v245
      %v247 = vmul.f32 %v238, %v245
      %v248 = vmul.f32 %v241, %v245
      %v249 = vmul.f32 %v244, %v245
      %v250 = vld [vmem:[%s2] sm:$0x1]
      %v251 = vld [vmem:[%s1] sm:$0x1]
      %v252 = vlaneseq
      %v253 = vshrl.u32 %v252, 7
      %v254 = vsub.s32 0, %v253
      %v255 = vrot.slane %v246, %v254
      %v256 = vlaneseq
      %v257 = vshrl.u32 %v256, 7
      %v258 = vsub.s32 0, %v257
      %v259 = vrot.slane %v247, %v258
      %v260 = vlaneseq
      %v261 = vshrl.u32 %v260, 7
      %v262 = vsub.s32 0, %v261
      %v263 = vrot.slane %v248, %v262
      %v264 = vlaneseq
      %v265 = vshrl.u32 %v264, 7
      %v266 = vsub.s32 0, %v265
      %v267 = vrot.slane %v249, %v266
      %v268 = vlaneseq
      %v269 = vshrl.u32 %v268, 7
      %v270 = vsub.s32 0, %v269
      %v271 = vrot.slane %v251, %v270
      %274 = vbcast.lane.b32.xlu0 %v271, 256
      %v275 = vpop.permute.xlu0 %274
      %s277 = sor.u32 256, 8
      %278 = vbcast.lane.b32.xlu0 %v271, %s277
      %v279 = vpop.permute.xlu0 %278
      %s281 = sor.u32 256, 16
      %282 = vbcast.lane.b32.xlu0 %v271, %s281
      %v283 = vpop.permute.xlu0 %282
      %s285 = sor.u32 256, 24
      %286 = vbcast.lane.b32.xlu0 %v271, %s285
      %v287 = vpop.permute.xlu0 %286
      %s289 = sor.u32 256, 32
      %290 = vbcast.lane.b32.xlu0 %v271, %s289
      %v291 = vpop.permute.xlu0 %290
      %s293 = sor.u32 256, 40
      %294 = vbcast.lane.b32.xlu0 %v271, %s293
      %v295 = vpop.permute.xlu0 %294
      %s297 = sor.u32 256, 48
      %298 = vbcast.lane.b32.xlu0 %v271, %s297
      %v299 = vpop.permute.xlu0 %298
      %s301 = sor.u32 256, 56
      %302 = vbcast.lane.b32.xlu0 %v271, %s301
      %v303 = vpop.permute.xlu0 %302
      %v312 = vmul.f32 %v255, %v275
      %v313 = vmul.f32 %v255, %v279
      %v314 = vmul.f32 %v255, %v283
      %v315 = vmul.f32 %v255, %v287
      %v316 = vmul.f32 %v255, %v291
      %v317 = vmul.f32 %v255, %v295
      %v318 = vmul.f32 %v255, %v299
      %v319 = vmul.f32 %v255, %v303
      %v320 = vmul.f32 %v259, %v275
      %v321 = vmul.f32 %v259, %v279
      %v322 = vmul.f32 %v259, %v283
      %v323 = vmul.f32 %v259, %v287
      %v324 = vmul.f32 %v259, %v291
      %v325 = vmul.f32 %v259, %v295
      %v326 = vmul.f32 %v259, %v299
      %v327 = vmul.f32 %v259, %v303
      %v328 = vmul.f32 %v263, %v275
      %v329 = vmul.f32 %v263, %v279
      %v330 = vmul.f32 %v263, %v283
      %v331 = vmul.f32 %v263, %v287
      %v332 = vmul.f32 %v263, %v291
      %v333 = vmul.f32 %v263, %v295
      %v334 = vmul.f32 %v263, %v299
      %v335 = vmul.f32 %v263, %v303
      %v336 = vmul.f32 %v267, %v275
      %v337 = vmul.f32 %v267, %v279
      %v338 = vmul.f32 %v267, %v283
      %v339 = vmul.f32 %v267, %v287
      %v340 = vmul.f32 %v267, %v291
      %v341 = vmul.f32 %v267, %v295
      %v342 = vmul.f32 %v267, %v299
      %v343 = vmul.f32 %v267, %v303
      %v345 = vlaneseq
      %v346 = vshrl.u32 %v345, 7
      %v347 = vsub.s32 0, %v346
      %v348 = vrot.slane %v250, %v347
      %382 = vset.pattern.permute.xlu0 0
      %383 = vperm.xlu0 %382, %v312
      %v384 = vpop.permute.xlu0 %383
      %385 = vset.pattern.permute.xlu0 0
      %386 = vperm.xlu0 %385, %v313
      %v387 = vpop.permute.xlu0 %386
      %388 = vset.pattern.permute.xlu0 0
      %389 = vperm.xlu0 %388, %v314
      %v390 = vpop.permute.xlu0 %389
      %391 = vset.pattern.permute.xlu0 0
      %392 = vperm.xlu0 %391, %v315
      %v393 = vpop.permute.xlu0 %392
      %394 = vset.pattern.permute.xlu0 0
      %395 = vperm.xlu0 %394, %v316
      %v396 = vpop.permute.xlu0 %395
      %397 = vset.pattern.permute.xlu0 0
      %398 = vperm.xlu0 %397, %v317
      %v399 = vpop.permute.xlu0 %398
      %400 = vset.pattern.permute.xlu0 0
      %401 = vperm.xlu0 %400, %v318
      %v402 = vpop.permute.xlu0 %401
      %403 = vset.pattern.permute.xlu0 0
      %404 = vperm.xlu0 %403, %v319
      %v405 = vpop.permute.xlu0 %404
      %406 = vset.pattern.permute.xlu0 0
      %407 = vperm.xlu0 %406, %v320
      %v408 = vpop.permute.xlu0 %407
      %409 = vset.pattern.permute.xlu0 0
      %410 = vperm.xlu0 %409, %v321
      %v411 = vpop.permute.xlu0 %410
      %412 = vset.pattern.permute.xlu0 0
      %413 = vperm.xlu0 %412, %v322
      %v414 = vpop.permute.xlu0 %413
      %415 = vset.pattern.permute.xlu0 0
      %416 = vperm.xlu0 %415, %v323
      %v417 = vpop.permute.xlu0 %416
      %418 = vset.pattern.permute.xlu0 0
      %419 = vperm.xlu0 %418, %v324
      %v420 = vpop.permute.xlu0 %419
      %421 = vset.pattern.permute.xlu0 0
      %422 = vperm.xlu0 %421, %v325
      %v423 = vpop.permute.xlu0 %422
      %424 = vset.pattern.permute.xlu0 0
      %425 = vperm.xlu0 %424, %v326
      %v426 = vpop.permute.xlu0 %425
      %427 = vset.pattern.permute.xlu0 0
      %428 = vperm.xlu0 %427, %v327
      %v429 = vpop.permute.xlu0 %428
      %430 = vset.pattern.permute.xlu0 0
      %431 = vperm.xlu0 %430, %v328
      %v432 = vpop.permute.xlu0 %431
      %433 = vset.pattern.permute.xlu0 0
      %434 = vperm.xlu0 %433, %v329
      %v435 = vpop.permute.xlu0 %434
      %436 = vset.pattern.permute.xlu0 0
      %437 = vperm.xlu0 %436, %v330
      %v438 = vpop.permute.xlu0 %437
      %439 = vset.pattern.permute.xlu0 0
      %440 = vperm.xlu0 %439, %v331
      %v441 = vpop.permute.xlu0 %440
      %442 = vset.pattern.permute.xlu0 0
      %443 = vperm.xlu0 %442, %v332
      %v444 = vpop.permute.xlu0 %443
      %445 = vset.pattern.permute.xlu0 0
      %446 = vperm.xlu0 %445, %v333
      %v447 = vpop.permute.xlu0 %446
      %448 = vset.pattern.permute.xlu0 0
      %449 = vperm.xlu0 %448, %v334
      %v450 = vpop.permute.xlu0 %449
      %451 = vset.pattern.permute.xlu0 0
      %452 = vperm.xlu0 %451, %v335
      %v453 = vpop.permute.xlu0 %452
      %454 = vset.pattern.permute.xlu0 0
      %455 = vperm.xlu0 %454, %v336
      %v456 = vpop.permute.xlu0 %455
      %457 = vset.pattern.permute.xlu0 0
      %458 = vperm.xlu0 %457, %v337
      %v459 = vpop.permute.xlu0 %458
      %460 = vset.pattern.permute.xlu0 0
      %461 = vperm.xlu0 %460, %v338
      %v462 = vpop.permute.xlu0 %461
      %463 = vset.pattern.permute.xlu0 0
      %464 = vperm.xlu0 %463, %v339
      %v465 = vpop.permute.xlu0 %464
      %466 = vset.pattern.permute.xlu0 0
      %467 = vperm.xlu0 %466, %v340
      %v468 = vpop.permute.xlu0 %467
      %469 = vset.pattern.permute.xlu0 0
      %470 = vperm.xlu0 %469, %v341
      %v471 = vpop.permute.xlu0 %470
      %472 = vset.pattern.permute.xlu0 0
      %473 = vperm.xlu0 %472, %v342
      %v474 = vpop.permute.xlu0 %473
      %475 = vset.pattern.permute.xlu0 0
      %476 = vperm.xlu0 %475, %v343
      %v477 = vpop.permute.xlu0 %476
      %v478 = vlaneseq
      %v479 = vand.u32 %v478, 127
      %v480 = vlaneseq
      %v481 = vshrl.u32 %v480, 7
      %v482 = vsub.s32 %v479, %v481
      %v483 = vrot.slane %v384, %v482
      %v484 = vadd.s32 %v479, 4294967288
      %v485 = vlaneseq
      %v486 = vshrl.u32 %v485, 7
      %v487 = vsub.s32 %v484, %v486
      %v488 = vrot.slane %v387, %v487
      %vm489 = vcmask 130112
      %v490 = vsel %vm489, %v488, %v483
      %v491 = vadd.s32 %v479, 4294967280
      %v492 = vlaneseq
      %v493 = vshrl.u32 %v492, 7
      %v494 = vsub.s32 %v491, %v493
      %v495 = vrot.slane %v390, %v494
      %vm496 = vcmask 195712
      %v497 = vsel %vm496, %v495, %v490
      %v498 = vadd.s32 %v479, 4294967272
      %v499 = vlaneseq
      %v500 = vshrl.u32 %v499, 7
      %v501 = vsub.s32 %v498, %v500
      %v502 = vrot.slane %v393, %v501
      %vm503 = vcmask 261312
      %v504 = vsel %vm503, %v502, %v497
      %v505 = vadd.s32 %v479, 4294967264
      %v506 = vlaneseq
      %v507 = vshrl.u32 %v506, 7
      %v508 = vsub.s32 %v505, %v507
      %v509 = vrot.slane %v396, %v508
      %vm510 = vcmask 326912
      %v511 = vsel %vm510, %v509, %v504
      %v512 = vadd.s32 %v479, 4294967256
      %v513 = vlaneseq
      %v514 = vshrl.u32 %v513, 7
      %v515 = vsub.s32 %v512, %v514
      %v516 = vrot.slane %v399, %v515
      %vm517 = vcmask 392512
      %v518 = vsel %vm517, %v516, %v511
      %v519 = vadd.s32 %v479, 4294967248
      %v520 = vlaneseq
      %v521 = vshrl.u32 %v520, 7
      %v522 = vsub.s32 %v519, %v521
      %v523 = vrot.slane %v402, %v522
      %vm524 = vcmask 458112
      %v525 = vsel %vm524, %v523, %v518
      %v526 = vadd.s32 %v479, 4294967240
      %v527 = vlaneseq
      %v528 = vshrl.u32 %v527, 7
      %v529 = vsub.s32 %v526, %v528
      %v530 = vrot.slane %v405, %v529
      %vm531 = vcmask 523712
      %v532 = vsel %vm531, %v530, %v525
      %v533 = vlaneseq
      %v534 = vshrl.u32 %v533, 7
      %v535 = vsub.s32 %v479, %v534
      %v536 = vrot.slane %v408, %v535
      %v537 = vlaneseq
      %v538 = vshrl.u32 %v537, 7
      %v539 = vsub.s32 %v484, %v538
      %v540 = vrot.slane %v411, %v539
      %v541 = vsel %vm489, %v540, %v536
      %v542 = vlaneseq
      %v543 = vshrl.u32 %v542, 7
      %v544 = vsub.s32 %v491, %v543
      %v545 = vrot.slane %v414, %v544
      %v546 = vsel %vm496, %v545, %v541
      %v547 = vlaneseq
      %v548 = vshrl.u32 %v547, 7
      %v549 = vsub.s32 %v498, %v548
      %v550 = vrot.slane %v417, %v549
      %v551 = vsel %vm503, %v550, %v546
      %v552 = vlaneseq
      %v553 = vshrl.u32 %v552, 7
      %v554 = vsub.s32 %v505, %v553
      %v555 = vrot.slane %v420, %v554
      %v556 = vsel %vm510, %v555, %v551
      %v557 = vlaneseq
      %v558 = vshrl.u32 %v557, 7
      %v559 = vsub.s32 %v512, %v558
      %v560 = vrot.slane %v423, %v559
      %v561 = vsel %vm517, %v560, %v556
      %v562 = vlaneseq
      %v563 = vshrl.u32 %v562, 7
      %v564 = vsub.s32 %v519, %v563
      %v565 = vrot.slane %v426, %v564
      %v566 = vsel %vm524, %v565, %v561
      %v567 = vlaneseq
      %v568 = vshrl.u32 %v567, 7
      %v569 = vsub.s32 %v526, %v568
      %v570 = vrot.slane %v429, %v569
      %v571 = vsel %vm531, %v570, %v566
      %v572 = vlaneseq
      %v573 = vshrl.u32 %v572, 7
      %v574 = vsub.s32 %v479, %v573
      %v575 = vrot.slane %v432, %v574
      %v576 = vlaneseq
      %v577 = vshrl.u32 %v576, 7
      %v578 = vsub.s32 %v484, %v577
      %v579 = vrot.slane %v435, %v578
      %v580 = vsel %vm489, %v579, %v575
      %v581 = vlaneseq
      %v582 = vshrl.u32 %v581, 7
      %v583 = vsub.s32 %v491, %v582
      %v584 = vrot.slane %v438, %v583
      %v585 = vsel %vm496, %v584, %v580
      %v586 = vlaneseq
      %v587 = vshrl.u32 %v586, 7
      %v588 = vsub.s32 %v498, %v587
      %v589 = vrot.slane %v441, %v588
      %v590 = vsel %vm503, %v589, %v585
      %v591 = vlaneseq
      %v592 = vshrl.u32 %v591, 7
      %v593 = vsub.s32 %v505, %v592
      %v594 = vrot.slane %v444, %v593
      %v595 = vsel %vm510, %v594, %v590
      %v596 = vlaneseq
      %v597 = vshrl.u32 %v596, 7
      %v598 = vsub.s32 %v512, %v597
      %v599 = vrot.slane %v447, %v598
      %v600 = vsel %vm517, %v599, %v595
      %v601 = vlaneseq
      %v602 = vshrl.u32 %v601, 7
      %v603 = vsub.s32 %v519, %v602
      %v604 = vrot.slane %v450, %v603
      %v605 = vsel %vm524, %v604, %v600
      %v606 = vlaneseq
      %v607 = vshrl.u32 %v606, 7
      %v608 = vsub.s32 %v526, %v607
      %v609 = vrot.slane %v453, %v608
      %v610 = vsel %vm531, %v609, %v605
      %v611 = vlaneseq
      %v612 = vshrl.u32 %v611, 7
      %v613 = vsub.s32 %v479, %v612
      %v614 = vrot.slane %v456, %v613
      %v615 = vlaneseq
      %v616 = vshrl.u32 %v615, 7
      %v617 = vsub.s32 %v484, %v616
      %v618 = vrot.slane %v459, %v617
      %v619 = vsel %vm489, %v618, %v614
      %v620 = vlaneseq
      %v621 = vshrl.u32 %v620, 7
      %v622 = vsub.s32 %v491, %v621
      %v623 = vrot.slane %v462, %v622
      %v624 = vsel %vm496, %v623, %v619
      %v625 = vlaneseq
      %v626 = vshrl.u32 %v625, 7
      %v627 = vsub.s32 %v498, %v626
      %v628 = vrot.slane %v465, %v627
      %v629 = vsel %vm503, %v628, %v624
      %v630 = vlaneseq
      %v631 = vshrl.u32 %v630, 7
      %v632 = vsub.s32 %v505, %v631
      %v633 = vrot.slane %v468, %v632
      %v634 = vsel %vm510, %v633, %v629
      %v635 = vlaneseq
      %v636 = vshrl.u32 %v635, 7
      %v637 = vsub.s32 %v512, %v636
      %v638 = vrot.slane %v471, %v637
      %v639 = vsel %vm517, %v638, %v634
      %v640 = vlaneseq
      %v641 = vshrl.u32 %v640, 7
      %v642 = vsub.s32 %v519, %v641
      %v643 = vrot.slane %v474, %v642
      %v644 = vsel %vm524, %v643, %v639
      %v645 = vlaneseq
      %v646 = vshrl.u32 %v645, 7
      %v647 = vsub.s32 %v526, %v646
      %v648 = vrot.slane %v477, %v647
      %v649 = vsel %vm531, %v648, %v644
      %vm650 = vcmask 1041409
      %v651 = vsel %vm650, %v571, %v532
      %vm652 = vcmask 1042434
      %v653 = vsel %vm652, %v610, %v651
      %vm654 = vcmask 1043459
      %v655 = vsel %vm654, %v649, %v653
      %v657 = vadd.f32 %v348, %v655
      %v658 = vld [vmem:[%s1 + $0x1] sm:$0x1]
      %v659 = vlaneseq
      %v660 = vshrl.u32 %v659, 7
      %v661 = vsub.s32 1, %v660
      %v662 = vrot.slane %v246, %v661
      %v663 = vlaneseq
      %v664 = vshrl.u32 %v663, 7
      %v665 = vsub.s32 1, %v664
      %v666 = vrot.slane %v247, %v665
      %v667 = vlaneseq
      %v668 = vshrl.u32 %v667, 7
      %v669 = vsub.s32 1, %v668
      %v670 = vrot.slane %v248, %v669
      %v671 = vlaneseq
      %v672 = vshrl.u32 %v671, 7
      %v673 = vsub.s32 1, %v672
      %v674 = vrot.slane %v249, %v673
      %v675 = vlaneseq
      %v676 = vshrl.u32 %v675, 7
      %v677 = vsub.s32 0, %v676
      %v678 = vrot.slane %v658, %v677
      %681 = vbcast.lane.b32.xlu0 %v678, 256
      %v682 = vpop.permute.xlu0 %681
      %s684 = sor.u32 256, 8
      %685 = vbcast.lane.b32.xlu0 %v678, %s684
      %v686 = vpop.permute.xlu0 %685
      %s688 = sor.u32 256, 16
      %689 = vbcast.lane.b32.xlu0 %v678, %s688
      %v690 = vpop.permute.xlu0 %689
      %s692 = sor.u32 256, 24
      %693 = vbcast.lane.b32.xlu0 %v678, %s692
      %v694 = vpop.permute.xlu0 %693
      %s696 = sor.u32 256, 32
      %697 = vbcast.lane.b32.xlu0 %v678, %s696
      %v698 = vpop.permute.xlu0 %697
      %s700 = sor.u32 256, 40
      %701 = vbcast.lane.b32.xlu0 %v678, %s700
      %v702 = vpop.permute.xlu0 %701
      %s704 = sor.u32 256, 48
      %705 = vbcast.lane.b32.xlu0 %v678, %s704
      %v706 = vpop.permute.xlu0 %705
      %s708 = sor.u32 256, 56
      %709 = vbcast.lane.b32.xlu0 %v678, %s708
      %v710 = vpop.permute.xlu0 %709
      %v719 = vmul.f32 %v662, %v682
      %v720 = vmul.f32 %v662, %v686
      %v721 = vmul.f32 %v662, %v690
      %v722 = vmul.f32 %v662, %v694
      %v723 = vmul.f32 %v662, %v698
      %v724 = vmul.f32 %v662, %v702
      %v725 = vmul.f32 %v662, %v706
      %v726 = vmul.f32 %v662, %v710
      %v727 = vmul.f32 %v666, %v682
      %v728 = vmul.f32 %v666, %v686
      %v729 = vmul.f32 %v666, %v690
      %v730 = vmul.f32 %v666, %v694
      %v731 = vmul.f32 %v666, %v698
      %v732 = vmul.f32 %v666, %v702
      %v733 = vmul.f32 %v666, %v706
      %v734 = vmul.f32 %v666, %v710
      %v735 = vmul.f32 %v670, %v682
      %v736 = vmul.f32 %v670, %v686
      %v737 = vmul.f32 %v670, %v690
      %v738 = vmul.f32 %v670, %v694
      %v739 = vmul.f32 %v670, %v698
      %v740 = vmul.f32 %v670, %v702
      %v741 = vmul.f32 %v670, %v706
      %v742 = vmul.f32 %v670, %v710
      %v743 = vmul.f32 %v674, %v682
      %v744 = vmul.f32 %v674, %v686
      %v745 = vmul.f32 %v674, %v690
      %v746 = vmul.f32 %v674, %v694
      %v747 = vmul.f32 %v674, %v698
      %v748 = vmul.f32 %v674, %v702
      %v749 = vmul.f32 %v674, %v706
      %v750 = vmul.f32 %v674, %v710
      %783 = vset.pattern.permute.xlu0 0
      %784 = vperm.xlu0 %783, %v719
      %v785 = vpop.permute.xlu0 %784
      %786 = vset.pattern.permute.xlu0 0
      %787 = vperm.xlu0 %786, %v720
      %v788 = vpop.permute.xlu0 %787
      %789 = vset.pattern.permute.xlu0 0
      %790 = vperm.xlu0 %789, %v721
      %v791 = vpop.permute.xlu0 %790
      %792 = vset.pattern.permute.xlu0 0
      %793 = vperm.xlu0 %792, %v722
      %v794 = vpop.permute.xlu0 %793
      %795 = vset.pattern.permute.xlu0 0
      %796 = vperm.xlu0 %795, %v723
      %v797 = vpop.permute.xlu0 %796
      %798 = vset.pattern.permute.xlu0 0
      %799 = vperm.xlu0 %798, %v724
      %v800 = vpop.permute.xlu0 %799
      %801 = vset.pattern.permute.xlu0 0
      %802 = vperm.xlu0 %801, %v725
      %v803 = vpop.permute.xlu0 %802
      %804 = vset.pattern.permute.xlu0 0
      %805 = vperm.xlu0 %804, %v726
      %v806 = vpop.permute.xlu0 %805
      %807 = vset.pattern.permute.xlu0 0
      %808 = vperm.xlu0 %807, %v727
      %v809 = vpop.permute.xlu0 %808
      %810 = vset.pattern.permute.xlu0 0
      %811 = vperm.xlu0 %810, %v728
      %v812 = vpop.permute.xlu0 %811
      %813 = vset.pattern.permute.xlu0 0
      %814 = vperm.xlu0 %813, %v729
      %v815 = vpop.permute.xlu0 %814
      %816 = vset.pattern.permute.xlu0 0
      %817 = vperm.xlu0 %816, %v730
      %v818 = vpop.permute.xlu0 %817
      %819 = vset.pattern.permute.xlu0 0
      %820 = vperm.xlu0 %819, %v731
      %v821 = vpop.permute.xlu0 %820
      %822 = vset.pattern.permute.xlu0 0
      %823 = vperm.xlu0 %822, %v732
      %v824 = vpop.permute.xlu0 %823
      %825 = vset.pattern.permute.xlu0 0
      %826 = vperm.xlu0 %825, %v733
      %v827 = vpop.permute.xlu0 %826
      %828 = vset.pattern.permute.xlu0 0
      %829 = vperm.xlu0 %828, %v734
      %v830 = vpop.permute.xlu0 %829
      %831 = vset.pattern.permute.xlu0 0
      %832 = vperm.xlu0 %831, %v735
      %v833 = vpop.permute.xlu0 %832
      %834 = vset.pattern.permute.xlu0 0
      %835 = vperm.xlu0 %834, %v736
      %v836 = vpop.permute.xlu0 %835
      %837 = vset.pattern.permute.xlu0 0
      %838 = vperm.xlu0 %837, %v737
      %v839 = vpop.permute.xlu0 %838
      %840 = vset.pattern.permute.xlu0 0
      %841 = vperm.xlu0 %840, %v738
      %v842 = vpop.permute.xlu0 %841
      %843 = vset.pattern.permute.xlu0 0
      %844 = vperm.xlu0 %843, %v739
      %v845 = vpop.permute.xlu0 %844
      %846 = vset.pattern.permute.xlu0 0
      %847 = vperm.xlu0 %846, %v740
      %v848 = vpop.permute.xlu0 %847
      %849 = vset.pattern.permute.xlu0 0
      %850 = vperm.xlu0 %849, %v741
      %v851 = vpop.permute.xlu0 %850
      %852 = vset.pattern.permute.xlu0 0
      %853 = vperm.xlu0 %852, %v742
      %v854 = vpop.permute.xlu0 %853
      %855 = vset.pattern.permute.xlu0 0
      %856 = vperm.xlu0 %855, %v743
      %v857 = vpop.permute.xlu0 %856
      %858 = vset.pattern.permute.xlu0 0
      %859 = vperm.xlu0 %858, %v744
      %v860 = vpop.permute.xlu0 %859
      %861 = vset.pattern.permute.xlu0 0
      %862 = vperm.xlu0 %861, %v745
      %v863 = vpop.permute.xlu0 %862
      %864 = vset.pattern.permute.xlu0 0
      %865 = vperm.xlu0 %864, %v746
      %v866 = vpop.permute.xlu0 %865
      %867 = vset.pattern.permute.xlu0 0
      %868 = vperm.xlu0 %867, %v747
      %v869 = vpop.permute.xlu0 %868
      %870 = vset.pattern.permute.xlu0 0
      %871 = vperm.xlu0 %870, %v748
      %v872 = vpop.permute.xlu0 %871
      %873 = vset.pattern.permute.xlu0 0
      %874 = vperm.xlu0 %873, %v749
      %v875 = vpop.permute.xlu0 %874
      %876 = vset.pattern.permute.xlu0 0
      %877 = vperm.xlu0 %876, %v750
      %v878 = vpop.permute.xlu0 %877
      %v879 = vlaneseq
      %v880 = vshrl.u32 %v879, 7
      %v881 = vsub.s32 %v479, %v880
      %v882 = vrot.slane %v785, %v881
      %v883 = vlaneseq
      %v884 = vshrl.u32 %v883, 7
      %v885 = vsub.s32 %v484, %v884
      %v886 = vrot.slane %v788, %v885
      %v887 = vsel %vm489, %v886, %v882
      %v888 = vlaneseq
      %v889 = vshrl.u32 %v888, 7
      %v890 = vsub.s32 %v491, %v889
      %v891 = vrot.slane %v791, %v890
      %v892 = vsel %vm496, %v891, %v887
      %v893 = vlaneseq
      %v894 = vshrl.u32 %v893, 7
      %v895 = vsub.s32 %v498, %v894
      %v896 = vrot.slane %v794, %v895
      %v897 = vsel %vm503, %v896, %v892
      %v898 = vlaneseq
      %v899 = vshrl.u32 %v898, 7
      %v900 = vsub.s32 %v505, %v899
      %v901 = vrot.slane %v797, %v900
      %v902 = vsel %vm510, %v901, %v897
      %v903 = vlaneseq
      %v904 = vshrl.u32 %v903, 7
      %v905 = vsub.s32 %v512, %v904
      %v906 = vrot.slane %v800, %v905
      %v907 = vsel %vm517, %v906, %v902
      %v908 = vlaneseq
      %v909 = vshrl.u32 %v908, 7
      %v910 = vsub.s32 %v519, %v909
      %v911 = vrot.slane %v803, %v910
      %v912 = vsel %vm524, %v911, %v907
      %v913 = vlaneseq
      %v914 = vshrl.u32 %v913, 7
      %v915 = vsub.s32 %v526, %v914
      %v916 = vrot.slane %v806, %v915
      %v917 = vsel %vm531, %v916, %v912
      %v918 = vlaneseq
      %v919 = vshrl.u32 %v918, 7
      %v920 = vsub.s32 %v479, %v919
      %v921 = vrot.slane %v809, %v920
      %v922 = vlaneseq
      %v923 = vshrl.u32 %v922, 7
      %v924 = vsub.s32 %v484, %v923
      %v925 = vrot.slane %v812, %v924
      %v926 = vsel %vm489, %v925, %v921
      %v927 = vlaneseq
      %v928 = vshrl.u32 %v927, 7
      %v929 = vsub.s32 %v491, %v928
      %v930 = vrot.slane %v815, %v929
      %v931 = vsel %vm496, %v930, %v926
      %v932 = vlaneseq
      %v933 = vshrl.u32 %v932, 7
      %v934 = vsub.s32 %v498, %v933
      %v935 = vrot.slane %v818, %v934
      %v936 = vsel %vm503, %v935, %v931
      %v937 = vlaneseq
      %v938 = vshrl.u32 %v937, 7
      %v939 = vsub.s32 %v505, %v938
      %v940 = vrot.slane %v821, %v939
      %v941 = vsel %vm510, %v940, %v936
      %v942 = vlaneseq
      %v943 = vshrl.u32 %v942, 7
      %v944 = vsub.s32 %v512, %v943
      %v945 = vrot.slane %v824, %v944
      %v946 = vsel %vm517, %v945, %v941
      %v947 = vlaneseq
      %v948 = vshrl.u32 %v947, 7
      %v949 = vsub.s32 %v519, %v948
      %v950 = vrot.slane %v827, %v949
      %v951 = vsel %vm524, %v950, %v946
      %v952 = vlaneseq
      %v953 = vshrl.u32 %v952, 7
      %v954 = vsub.s32 %v526, %v953
      %v955 = vrot.slane %v830, %v954
      %v956 = vsel %vm531, %v955, %v951
      %v957 = vlaneseq
      %v958 = vshrl.u32 %v957, 7
      %v959 = vsub.s32 %v479, %v958
      %v960 = vrot.slane %v833, %v959
      %v961 = vlaneseq
      %v962 = vshrl.u32 %v961, 7
      %v963 = vsub.s32 %v484, %v962
      %v964 = vrot.slane %v836, %v963
      %v965 = vsel %vm489, %v964, %v960
      %v966 = vlaneseq
      %v967 = vshrl.u32 %v966, 7
      %v968 = vsub.s32 %v491, %v967
      %v969 = vrot.slane %v839, %v968
      %v970 = vsel %vm496, %v969, %v965
      %v971 = vlaneseq
      %v972 = vshrl.u32 %v971, 7
      %v973 = vsub.s32 %v498, %v972
      %v974 = vrot.slane %v842, %v973
      %v975 = vsel %vm503, %v974, %v970
      %v976 = vlaneseq
      %v977 = vshrl.u32 %v976, 7
      %v978 = vsub.s32 %v505, %v977
      %v979 = vrot.slane %v845, %v978
      %v980 = vsel %vm510, %v979, %v975
      %v981 = vlaneseq
      %v982 = vshrl.u32 %v981, 7
      %v983 = vsub.s32 %v512, %v982
      %v984 = vrot.slane %v848, %v983
      %v985 = vsel %vm517, %v984, %v980
      %v986 = vlaneseq
      %v987 = vshrl.u32 %v986, 7
      %v988 = vsub.s32 %v519, %v987
      %v989 = vrot.slane %v851, %v988
      %v990 = vsel %vm524, %v989, %v985
      %v991 = vlaneseq
      %v992 = vshrl.u32 %v991, 7
      %v993 = vsub.s32 %v526, %v992
      %v994 = vrot.slane %v854, %v993
      %v995 = vsel %vm531, %v994, %v990
      %v996 = vlaneseq
      %v997 = vshrl.u32 %v996, 7
      %v998 = vsub.s32 %v479, %v997
      %v999 = vrot.slane %v857, %v998
      %v1000 = vlaneseq
      %v1001 = vshrl.u32 %v1000, 7
      %v1002 = vsub.s32 %v484, %v1001
      %v1003 = vrot.slane %v860, %v1002
      %v1004 = vsel %vm489, %v1003, %v999
      %v1005 = vlaneseq
      %v1006 = vshrl.u32 %v1005, 7
      %v1007 = vsub.s32 %v491, %v1006
      %v1008 = vrot.slane %v863, %v1007
      %v1009 = vsel %vm496, %v1008, %v1004
      %v1010 = vlaneseq
      %v1011 = vshrl.u32 %v1010, 7
      %v1012 = vsub.s32 %v498, %v1011
      %v1013 = vrot.slane %v866, %v1012
      %v1014 = vsel %vm503, %v1013, %v1009
      %v1015 = vlaneseq
      %v1016 = vshrl.u32 %v1015, 7
      %v1017 = vsub.s32 %v505, %v1016
      %v1018 = vrot.slane %v869, %v1017
      %v1019 = vsel %vm510, %v1018, %v1014
      %v1020 = vlaneseq
      %v1021 = vshrl.u32 %v1020, 7
      %v1022 = vsub.s32 %v512, %v1021
      %v1023 = vrot.slane %v872, %v1022
      %v1024 = vsel %vm517, %v1023, %v1019
      %v1025 = vlaneseq
      %v1026 = vshrl.u32 %v1025, 7
      %v1027 = vsub.s32 %v519, %v1026
      %v1028 = vrot.slane %v875, %v1027
      %v1029 = vsel %vm524, %v1028, %v1024
      %v1030 = vlaneseq
      %v1031 = vshrl.u32 %v1030, 7
      %v1032 = vsub.s32 %v526, %v1031
      %v1033 = vrot.slane %v878, %v1032
      %v1034 = vsel %vm531, %v1033, %v1029
      %v1035 = vsel %vm650, %v956, %v917
      %v1036 = vsel %vm652, %v995, %v1035
      %v1037 = vsel %vm654, %v1034, %v1036
      %v1039 = vadd.f32 %v657, %v1037
      %v1040 = vld [vmem:[%s1 + $0x2] sm:$0x1]
      %v1041 = vlaneseq
      %v1042 = vshrl.u32 %v1041, 7
      %v1043 = vsub.s32 2, %v1042
      %v1044 = vrot.slane %v246, %v1043
      %v1045 = vlaneseq
      %v1046 = vshrl.u32 %v1045, 7
      %v1047 = vsub.s32 2, %v1046
      %v1048 = vrot.slane %v247, %v1047
      %v1049 = vlaneseq
      %v1050 = vshrl.u32 %v1049, 7
      %v1051 = vsub.s32 2, %v1050
      %v1052 = vrot.slane %v248, %v1051
      %v1053 = vlaneseq
      %v1054 = vshrl.u32 %v1053, 7
      %v1055 = vsub.s32 2, %v1054
      %v1056 = vrot.slane %v249, %v1055
      %v1057 = vlaneseq
      %v1058 = vshrl.u32 %v1057, 7
      %v1059 = vsub.s32 0, %v1058
      %v1060 = vrot.slane %v1040, %v1059
      %1063 = vbcast.lane.b32.xlu0 %v1060, 256
      %v1064 = vpop.permute.xlu0 %1063
      %s1066 = sor.u32 256, 8
      %1067 = vbcast.lane.b32.xlu0 %v1060, %s1066
      %v1068 = vpop.permute.xlu0 %1067
      %s1070 = sor.u32 256, 16
      %1071 = vbcast.lane.b32.xlu0 %v1060, %s1070
      %v1072 = vpop.permute.xlu0 %1071
      %s1074 = sor.u32 256, 24
      %1075 = vbcast.lane.b32.xlu0 %v1060, %s1074
      %v1076 = vpop.permute.xlu0 %1075
      %s1078 = sor.u32 256, 32
      %1079 = vbcast.lane.b32.xlu0 %v1060, %s1078
      %v1080 = vpop.permute.xlu0 %1079
      %s1082 = sor.u32 256, 40
      %1083 = vbcast.lane.b32.xlu0 %v1060, %s1082
      %v1084 = vpop.permute.xlu0 %1083
      %s1086 = sor.u32 256, 48
      %1087 = vbcast.lane.b32.xlu0 %v1060, %s1086
      %v1088 = vpop.permute.xlu0 %1087
      %s1090 = sor.u32 256, 56
      %1091 = vbcast.lane.b32.xlu0 %v1060, %s1090
      %v1092 = vpop.permute.xlu0 %1091
      %v1101 = vmul.f32 %v1044, %v1064
      %v1102 = vmul.f32 %v1044, %v1068
      %v1103 = vmul.f32 %v1044, %v1072
      %v1104 = vmul.f32 %v1044, %v1076
      %v1105 = vmul.f32 %v1044, %v1080
      %v1106 = vmul.f32 %v1044, %v1084
      %v1107 = vmul.f32 %v1044, %v1088
      %v1108 = vmul.f32 %v1044, %v1092
      %v1109 = vmul.f32 %v1048, %v1064
      %v1110 = vmul.f32 %v1048, %v1068
      %v1111 = vmul.f32 %v1048, %v1072
      %v1112 = vmul.f32 %v1048, %v1076
      %v1113 = vmul.f32 %v1048, %v1080
      %v1114 = vmul.f32 %v1048, %v1084
      %v1115 = vmul.f32 %v1048, %v1088
      %v1116 = vmul.f32 %v1048, %v1092
      %v1117 = vmul.f32 %v1052, %v1064
      %v1118 = vmul.f32 %v1052, %v1068
      %v1119 = vmul.f32 %v1052, %v1072
      %v1120 = vmul.f32 %v1052, %v1076
      %v1121 = vmul.f32 %v1052, %v1080
      %v1122 = vmul.f32 %v1052, %v1084
      %v1123 = vmul.f32 %v1052, %v1088
      %v1124 = vmul.f32 %v1052, %v1092
      %v1125 = vmul.f32 %v1056, %v1064
      %v1126 = vmul.f32 %v1056, %v1068
      %v1127 = vmul.f32 %v1056, %v1072
      %v1128 = vmul.f32 %v1056, %v1076
      %v1129 = vmul.f32 %v1056, %v1080
      %v1130 = vmul.f32 %v1056, %v1084
      %v1131 = vmul.f32 %v1056, %v1088
      %v1132 = vmul.f32 %v1056, %v1092
      %1165 = vset.pattern.permute.xlu0 0
      %1166 = vperm.xlu0 %1165, %v1101
      %v1167 = vpop.permute.xlu0 %1166
      %1168 = vset.pattern.permute.xlu0 0
      %1169 = vperm.xlu0 %1168, %v1102
      %v1170 = vpop.permute.xlu0 %1169
      %1171 = vset.pattern.permute.xlu0 0
      %1172 = vperm.xlu0 %1171, %v1103
      %v1173 = vpop.permute.xlu0 %1172
      %1174 = vset.pattern.permute.xlu0 0
      %1175 = vperm.xlu0 %1174, %v1104
      %v1176 = vpop.permute.xlu0 %1175
      %1177 = vset.pattern.permute.xlu0 0
      %1178 = vperm.xlu0 %1177, %v1105
      %v1179 = vpop.permute.xlu0 %1178
      %1180 = vset.pattern.permute.xlu0 0
      %1181 = vperm.xlu0 %1180, %v1106
      %v1182 = vpop.permute.xlu0 %1181
      %1183 = vset.pattern.permute.xlu0 0
      %1184 = vperm.xlu0 %1183, %v1107
      %v1185 = vpop.permute.xlu0 %1184
      %1186 = vset.pattern.permute.xlu0 0
      %1187 = vperm.xlu0 %1186, %v1108
      %v1188 = vpop.permute.xlu0 %1187
      %1189 = vset.pattern.permute.xlu0 0
      %1190 = vperm.xlu0 %1189, %v1109
      %v1191 = vpop.permute.xlu0 %1190
      %1192 = vset.pattern.permute.xlu0 0
      %1193 = vperm.xlu0 %1192, %v1110
      %v1194 = vpop.permute.xlu0 %1193
      %1195 = vset.pattern.permute.xlu0 0
      %1196 = vperm.xlu0 %1195, %v1111
      %v1197 = vpop.permute.xlu0 %1196
      %1198 = vset.pattern.permute.xlu0 0
      %1199 = vperm.xlu0 %1198, %v1112
      %v1200 = vpop.permute.xlu0 %1199
      %1201 = vset.pattern.permute.xlu0 0
      %1202 = vperm.xlu0 %1201, %v1113
      %v1203 = vpop.permute.xlu0 %1202
      %1204 = vset.pattern.permute.xlu0 0
      %1205 = vperm.xlu0 %1204, %v1114
      %v1206 = vpop.permute.xlu0 %1205
      %1207 = vset.pattern.permute.xlu0 0
      %1208 = vperm.xlu0 %1207, %v1115
      %v1209 = vpop.permute.xlu0 %1208
      %1210 = vset.pattern.permute.xlu0 0
      %1211 = vperm.xlu0 %1210, %v1116
      %v1212 = vpop.permute.xlu0 %1211
      %1213 = vset.pattern.permute.xlu0 0
      %1214 = vperm.xlu0 %1213, %v1117
      %v1215 = vpop.permute.xlu0 %1214
      %1216 = vset.pattern.permute.xlu0 0
      %1217 = vperm.xlu0 %1216, %v1118
      %v1218 = vpop.permute.xlu0 %1217
      %1219 = vset.pattern.permute.xlu0 0
      %1220 = vperm.xlu0 %1219, %v1119
      %v1221 = vpop.permute.xlu0 %1220
      %1222 = vset.pattern.permute.xlu0 0
      %1223 = vperm.xlu0 %1222, %v1120
      %v1224 = vpop.permute.xlu0 %1223
      %1225 = vset.pattern.permute.xlu0 0
      %1226 = vperm.xlu0 %1225, %v1121
      %v1227 = vpop.permute.xlu0 %1226
      %1228 = vset.pattern.permute.xlu0 0
      %1229 = vperm.xlu0 %1228, %v1122
      %v1230 = vpop.permute.xlu0 %1229
      %1231 = vset.pattern.permute.xlu0 0
      %1232 = vperm.xlu0 %1231, %v1123
      %v1233 = vpop.permute.xlu0 %1232
      %1234 = vset.pattern.permute.xlu0 0
      %1235 = vperm.xlu0 %1234, %v1124
      %v1236 = vpop.permute.xlu0 %1235
      %1237 = vset.pattern.permute.xlu0 0
      %1238 = vperm.xlu0 %1237, %v1125
      %v1239 = vpop.permute.xlu0 %1238
      %1240 = vset.pattern.permute.xlu0 0
      %1241 = vperm.xlu0 %1240, %v1126
      %v1242 = vpop.permute.xlu0 %1241
      %1243 = vset.pattern.permute.xlu0 0
      %1244 = vperm.xlu0 %1243, %v1127
      %v1245 = vpop.permute.xlu0 %1244
      %1246 = vset.pattern.permute.xlu0 0
      %1247 = vperm.xlu0 %1246, %v1128
      %v1248 = vpop.permute.xlu0 %1247
      %1249 = vset.pattern.permute.xlu0 0
      %1250 = vperm.xlu0 %1249, %v1129
      %v1251 = vpop.permute.xlu0 %1250
      %1252 = vset.pattern.permute.xlu0 0
      %1253 = vperm.xlu0 %1252, %v1130
      %v1254 = vpop.permute.xlu0 %1253
      %1255 = vset.pattern.permute.xlu0 0
      %1256 = vperm.xlu0 %1255, %v1131
      %v1257 = vpop.permute.xlu0 %1256
      %1258 = vset.pattern.permute.xlu0 0
      %1259 = vperm.xlu0 %1258, %v1132
      %v1260 = vpop.permute.xlu0 %1259
      %v1261 = vlaneseq
      %v1262 = vshrl.u32 %v1261, 7
      %v1263 = vsub.s32 %v479, %v1262
      %v1264 = vrot.slane %v1167, %v1263
      %v1265 = vlaneseq
      %v1266 = vshrl.u32 %v1265, 7
      %v1267 = vsub.s32 %v484, %v1266
      %v1268 = vrot.slane %v1170, %v1267
      %v1269 = vsel %vm489, %v1268, %v1264
      %v1270 = vlaneseq
      %v1271 = vshrl.u32 %v1270, 7
      %v1272 = vsub.s32 %v491, %v1271
      %v1273 = vrot.slane %v1173, %v1272
      %v1274 = vsel %vm496, %v1273, %v1269
      %v1275 = vlaneseq
      %v1276 = vshrl.u32 %v1275, 7
      %v1277 = vsub.s32 %v498, %v1276
      %v1278 = vrot.slane %v1176, %v1277
      %v1279 = vsel %vm503, %v1278, %v1274
      %v1280 = vlaneseq
      %v1281 = vshrl.u32 %v1280, 7
      %v1282 = vsub.s32 %v505, %v1281
      %v1283 = vrot.slane %v1179, %v1282
      %v1284 = vsel %vm510, %v1283, %v1279
      %v1285 = vlaneseq
      %v1286 = vshrl.u32 %v1285, 7
      %v1287 = vsub.s32 %v512, %v1286
      %v1288 = vrot.slane %v1182, %v1287
      %v1289 = vsel %vm517, %v1288, %v1284
      %v1290 = vlaneseq
      %v1291 = vshrl.u32 %v1290, 7
      %v1292 = vsub.s32 %v519, %v1291
      %v1293 = vrot.slane %v1185, %v1292
      %v1294 = vsel %vm524, %v1293, %v1289
      %v1295 = vlaneseq
      %v1296 = vshrl.u32 %v1295, 7
      %v1297 = vsub.s32 %v526, %v1296
      %v1298 = vrot.slane %v1188, %v1297
      %v1299 = vsel %vm531, %v1298, %v1294
      %v1300 = vlaneseq
      %v1301 = vshrl.u32 %v1300, 7
      %v1302 = vsub.s32 %v479, %v1301
      %v1303 = vrot.slane %v1191, %v1302
      %v1304 = vlaneseq
      %v1305 = vshrl.u32 %v1304, 7
      %v1306 = vsub.s32 %v484, %v1305
      %v1307 = vrot.slane %v1194, %v1306
      %v1308 = vsel %vm489, %v1307, %v1303
      %v1309 = vlaneseq
      %v1310 = vshrl.u32 %v1309, 7
      %v1311 = vsub.s32 %v491, %v1310
      %v1312 = vrot.slane %v1197, %v1311
      %v1313 = vsel %vm496, %v1312, %v1308
      %v1314 = vlaneseq
      %v1315 = vshrl.u32 %v1314, 7
      %v1316 = vsub.s32 %v498, %v1315
      %v1317 = vrot.slane %v1200, %v1316
      %v1318 = vsel %vm503, %v1317, %v1313
      %v1319 = vlaneseq
      %v1320 = vshrl.u32 %v1319, 7
      %v1321 = vsub.s32 %v505, %v1320
      %v1322 = vrot.slane %v1203, %v1321
      %v1323 = vsel %vm510, %v1322, %v1318
      %v1324 = vlaneseq
      %v1325 = vshrl.u32 %v1324, 7
      %v1326 = vsub.s32 %v512, %v1325
      %v1327 = vrot.slane %v1206, %v1326
      %v1328 = vsel %vm517, %v1327, %v1323
      %v1329 = vlaneseq
      %v1330 = vshrl.u32 %v1329, 7
      %v1331 = vsub.s32 %v519, %v1330
      %v1332 = vrot.slane %v1209, %v1331
      %v1333 = vsel %vm524, %v1332, %v1328
      %v1334 = vlaneseq
      %v1335 = vshrl.u32 %v1334, 7
      %v1336 = vsub.s32 %v526, %v1335
      %v1337 = vrot.slane %v1212, %v1336
      %v1338 = vsel %vm531, %v1337, %v1333
      %v1339 = vlaneseq
      %v1340 = vshrl.u32 %v1339, 7
      %v1341 = vsub.s32 %v479, %v1340
      %v1342 = vrot.slane %v1215, %v1341
      %v1343 = vlaneseq
      %v1344 = vshrl.u32 %v1343, 7
      %v1345 = vsub.s32 %v484, %v1344
      %v1346 = vrot.slane %v1218, %v1345
      %v1347 = vsel %vm489, %v1346, %v1342
      %v1348 = vlaneseq
      %v1349 = vshrl.u32 %v1348, 7
      %v1350 = vsub.s32 %v491, %v1349
      %v1351 = vrot.slane %v1221, %v1350
      %v1352 = vsel %vm496, %v1351, %v1347
      %v1353 = vlaneseq
      %v1354 = vshrl.u32 %v1353, 7
      %v1355 = vsub.s32 %v498, %v1354
      %v1356 = vrot.slane %v1224, %v1355
      %v1357 = vsel %vm503, %v1356, %v1352
      %v1358 = vlaneseq
      %v1359 = vshrl.u32 %v1358, 7
      %v1360 = vsub.s32 %v505, %v1359
      %v1361 = vrot.slane %v1227, %v1360
      %v1362 = vsel %vm510, %v1361, %v1357
      %v1363 = vlaneseq
      %v1364 = vshrl.u32 %v1363, 7
      %v1365 = vsub.s32 %v512, %v1364
      %v1366 = vrot.slane %v1230, %v1365
      %v1367 = vsel %vm517, %v1366, %v1362
      %v1368 = vlaneseq
      %v1369 = vshrl.u32 %v1368, 7
      %v1370 = vsub.s32 %v519, %v1369
      %v1371 = vrot.slane %v1233, %v1370
      %v1372 = vsel %vm524, %v1371, %v1367
      %v1373 = vlaneseq
      %v1374 = vshrl.u32 %v1373, 7
      %v1375 = vsub.s32 %v526, %v1374
      %v1376 = vrot.slane %v1236, %v1375
      %v1377 = vsel %vm531, %v1376, %v1372
      %v1378 = vlaneseq
      %v1379 = vshrl.u32 %v1378, 7
      %v1380 = vsub.s32 %v479, %v1379
      %v1381 = vrot.slane %v1239, %v1380
      %v1382 = vlaneseq
      %v1383 = vshrl.u32 %v1382, 7
      %v1384 = vsub.s32 %v484, %v1383
      %v1385 = vrot.slane %v1242, %v1384
      %v1386 = vsel %vm489, %v1385, %v1381
      %v1387 = vlaneseq
      %v1388 = vshrl.u32 %v1387, 7
      %v1389 = vsub.s32 %v491, %v1388
      %v1390 = vrot.slane %v1245, %v1389
      %v1391 = vsel %vm496, %v1390, %v1386
      %v1392 = vlaneseq
      %v1393 = vshrl.u32 %v1392, 7
      %v1394 = vsub.s32 %v498, %v1393
      %v1395 = vrot.slane %v1248, %v1394
      %v1396 = vsel %vm503, %v1395, %v1391
      %v1397 = vlaneseq
      %v1398 = vshrl.u32 %v1397, 7
      %v1399 = vsub.s32 %v505, %v1398
      %v1400 = vrot.slane %v1251, %v1399
      %v1401 = vsel %vm510, %v1400, %v1396
      %v1402 = vlaneseq
      %v1403 = vshrl.u32 %v1402, 7
      %v1404 = vsub.s32 %v512, %v1403
      %v1405 = vrot.slane %v1254, %v1404
      %v1406 = vsel %vm517, %v1405, %v1401
      %v1407 = vlaneseq
      %v1408 = vshrl.u32 %v1407, 7
      %v1409 = vsub.s32 %v519, %v1408
      %v1410 = vrot.slane %v1257, %v1409
      %v1411 = vsel %vm524, %v1410, %v1406
      %v1412 = vlaneseq
      %v1413 = vshrl.u32 %v1412, 7
      %v1414 = vsub.s32 %v526, %v1413
      %v1415 = vrot.slane %v1260, %v1414
      %v1416 = vsel %vm531, %v1415, %v1411
      %v1417 = vsel %vm650, %v1338, %v1299
      %v1418 = vsel %vm652, %v1377, %v1417
      %v1419 = vsel %vm654, %v1416, %v1418
      %v1421 = vadd.f32 %v1039, %v1419
      %v1422 = vld [vmem:[%s3] sm:$0xff]
      %v1423 = vld [vmem:[%s3 + $0x8] sm:$0xff]
      %v1424 = vld [vmem:[%s3 + $0x10] sm:$0xff]
      %v1425 = vld [vmem:[%s3 + $0x18] sm:$0xff]
      %v1426 = vld [vmem:[%s3 + $0x20] sm:$0xff]
      %v1427 = vld [vmem:[%s3 + $0x28] sm:$0xff]
      %v1428 = vld [vmem:[%s3 + $0x30] sm:$0xff]
      %v1429 = vld [vmem:[%s3 + $0x38] sm:$0xff]
      %vm1430 = vcmask 523264
      %v1432 = vsel %vm1430, %v1421, 0
      %1434 = vmatprep.subr.mxu0 0.0
      %1435 = vmatpush1.msra.mxu0 %v1422
      %1436 = vmatprep.subr.mxu0 0.0
      %1437 = vmatpush1.msra.mxu0 %v1423
      %1438 = vmatprep.subr.mxu0 0.0
      %1439 = vmatpush1.msra.mxu0 %v1424
      %1440 = vmatprep.subr.mxu0 0.0
      %1441 = vmatpush1.msra.mxu0 %v1425
      %1442 = vmatprep.subr.mxu0 0.0
      %1443 = vmatpush1.msra.mxu0 %v1426
      %1444 = vmatprep.subr.mxu0 0.0
      %1445 = vmatpush1.msra.mxu0 %v1427
      %1446 = vmatprep.subr.mxu0 0.0
      %1447 = vmatpush1.msra.mxu0 %v1428
      %1448 = vmatprep.subr.mxu0 0.0
      %1449 = vmatpush1.msra.mxu0 %v1429
      %1450 = vmatprep.subr.mxu0 0.0
      %1451 = vmatpush1.msra.mxu0 0.0
      %1452 = vmatprep.subr.mxu0 0.0
      %1453 = vmatpush1.msra.mxu0 0.0
      %1454 = vmatprep.subr.mxu0 0.0
      %1455 = vmatpush1.msra.mxu0 0.0
      %1456 = vmatprep.subr.mxu0 0.0
      %1457 = vmatpush1.msra.mxu0 0.0
      %1458 = vmatprep.subr.mxu0 0.0
      %1459 = vmatpush1.msra.mxu0 0.0
      %1460 = vmatprep.subr.mxu0 0.0
      %1461 = vmatpush1.msra.mxu0 0.0
      %1462 = vmatprep.subr.mxu0 0.0
      %1463 = vmatpush1.msra.mxu0 0.0
      %1464 = vmatprep.subr.mxu0 0.0
      %1465 = vmatpush1.msra.mxu0 0.0
      %1466 = vmatprep.subr.mxu0 0.0
      %1467 = vmatpush1.msra.mxu0 0.0
      %1468 = vmatprep.subr.mxu0 0.0
      %1469 = vmatpush1.msra.mxu0 0.0
      %1470 = vmatprep.subr.mxu0 0.0
      %1471 = vmatpush1.msra.mxu0 0.0
      %1472 = vmatprep.subr.mxu0 0.0
      %1473 = vmatpush1.msra.mxu0 0.0
      %1474 = vmatprep.subr.mxu0 0.0
      %1475 = vmatpush1.msra.mxu0 0.0
      %1476 = vmatprep.subr.mxu0 0.0
      %1477 = vmatpush1.msra.mxu0 0.0
      %1478 = vmatprep.subr.mxu0 0.0
      %1479 = vmatpush1.msra.mxu0 0.0
      %1480 = vmatprep.subr.mxu0 0.0
      %1481 = vmatpush1.msra.mxu0 0.0
      %1482 = vmatprep.subr.mxu0 0.0
      %1483 = vmatpush1.msra.mxu0 0.0
      %1484 = vmatprep.subr.mxu0 0.0
      %1485 = vmatpush1.msra.mxu0 0.0
      %1486 = vmatprep.subr.mxu0 0.0
      %1487 = vmatpush1.msra.mxu0 0.0
      %1488 = vmatprep.subr.mxu0 0.0
      %1489 = vmatpush1.msra.mxu0 0.0
      %1490 = vmatprep.subr.mxu0 0.0
      %1491 = vmatpush1.msra.mxu0 0.0
      %1492 = vmatprep.subr.mxu0 0.0
      %1493 = vmatpush1.msra.mxu0 0.0
      %1494 = vmatprep.subr.mxu0 0.0
      %1495 = vmatpush1.msra.mxu0 0.0
      %1496 = vmatprep.subr.mxu0 0.0
      %1497 = vmatpush1.msra.mxu0 0.0
      %1498 = vmatprep.mubr.f32.mxu0 0.0
      %1499 = vmatmul.mubr.f32.gmra.mrb[0].mxu0 %v1432
      %v1500 = vpop.f32.mrb[0].mxu0
      %v1501 = vadd.f32 0.0, %v1500
      %v1502 = vpop.f32.mrb[0].mxu0
      %1503 = vdwg.mxu0
      %v1504 = vmax.f32 %v1501, 0.0
      %v1505 = vld [vmem:[%s4] sm:$0xff]
      %vm1506 = vcmask 64512
      %v1508 = vsel %vm1506, %v1504, 0
      %1510 = vmatprep.subr.mxu0 0.0
      %1511 = vmatpush1.msra.mxu0 %v1505
      %1512 = vmatprep.subr.mxu0 0.0
      %1513 = vmatpush1.msra.mxu0 0.0
      %1514 = vmatprep.subr.mxu0 0.0
      %1515 = vmatpush1.msra.mxu0 0.0
      %1516 = vmatprep.subr.mxu0 0.0
      %1517 = vmatpush1.msra.mxu0 0.0
      %1518 = vmatprep.subr.mxu0 0.0
      %1519 = vmatpush1.msra.mxu0 0.0
      %1520 = vmatprep.subr.mxu0 0.0
      %1521 = vmatpush1.msra.mxu0 0.0
      %1522 = vmatprep.subr.mxu0 0.0
      %1523 = vmatpush1.msra.mxu0 0.0
      %1524 = vmatprep.subr.mxu0 0.0
      %1525 = vmatpush1.msra.mxu0 0.0
      %1526 = vmatprep.subr.mxu0 0.0
      %1527 = vmatpush1.msra.mxu0 0.0
      %1528 = vmatprep.subr.mxu0 0.0
      %1529 = vmatpush1.msra.mxu0 0.0
      %1530 = vmatprep.subr.mxu0 0.0
      %1531 = vmatpush1.msra.mxu0 0.0
      %1532 = vmatprep.subr.mxu0 0.0
      %1533 = vmatpush1.msra.mxu0 0.0
      %1534 = vmatprep.subr.mxu0 0.0
      %1535 = vmatpush1.msra.mxu0 0.0
      %1536 = vmatprep.subr.mxu0 0.0
      %1537 = vmatpush1.msra.mxu0 0.0
      %1538 = vmatprep.subr.mxu0 0.0
      %1539 = vmatpush1.msra.mxu0 0.0
      %1540 = vmatprep.subr.mxu0 0.0
      %1541 = vmatpush1.msra.mxu0 0.0
      %1542 = vmatprep.subr.mxu0 0.0
      %1543 = vmatpush1.msra.mxu0 0.0
      %1544 = vmatprep.subr.mxu0 0.0
      %1545 = vmatpush1.msra.mxu0 0.0
      %1546 = vmatprep.subr.mxu0 0.0
      %1547 = vmatpush1.msra.mxu0 0.0
      %1548 = vmatprep.subr.mxu0 0.0
      %1549 = vmatpush1.msra.mxu0 0.0
      %1550 = vmatprep.subr.mxu0 0.0
      %1551 = vmatpush1.msra.mxu0 0.0
      %1552 = vmatprep.subr.mxu0 0.0
      %1553 = vmatpush1.msra.mxu0 0.0
      %1554 = vmatprep.subr.mxu0 0.0
      %1555 = vmatpush1.msra.mxu0 0.0
      %1556 = vmatprep.subr.mxu0 0.0
      %1557 = vmatpush1.msra.mxu0 0.0
      %1558 = vmatprep.subr.mxu0 0.0
      %1559 = vmatpush1.msra.mxu0 0.0
      %1560 = vmatprep.subr.mxu0 0.0
      %1561 = vmatpush1.msra.mxu0 0.0
      %1562 = vmatprep.subr.mxu0 0.0
      %1563 = vmatpush1.msra.mxu0 0.0
      %1564 = vmatprep.subr.mxu0 0.0
      %1565 = vmatpush1.msra.mxu0 0.0
      %1566 = vmatprep.subr.mxu0 0.0
      %1567 = vmatpush1.msra.mxu0 0.0
      %1568 = vmatprep.subr.mxu0 0.0
      %1569 = vmatpush1.msra.mxu0 0.0
      %1570 = vmatprep.subr.mxu0 0.0
      %1571 = vmatpush1.msra.mxu0 0.0
      %1572 = vmatprep.subr.mxu0 0.0
      %1573 = vmatpush1.msra.mxu0 0.0
      %1574 = vmatprep.mubr.f32.mxu0 0.0
      %1575 = vmatmul.mubr.f32.gmra.mrb[0].mxu0 %v1508
      %v1576 = vpop.f32.mrb[0].mxu0
      %v1577 = vadd.f32 0.0, %v1576
      %v1578 = vpop.f32.mrb[0].mxu0
      %1579 = vdwg.mxu0
      %vm1580 = vcmask 1043456
      %v1581 = vsel %vm1580, %v1577, -inf
      %1582 = vmax.xlane.f32.xlu0 %v1581
      %v1583 = vpop.xlane.xlu0 %1582
      %v1584 = vsub.f32 %v1577, %v1583
      %v1585 = vmul.f32 %v1584, 1.442695
      %v1586 = vpow.pop %v1585
      %v1587 = vsel %vm1580, %v1586, 0.0
      %1588 = vadd.xlane.f32.xlu0 %v1587
      %v1589 = vpop.xlane.xlu0 %1588
      %v1590 = vrcp.pop %v1589
      %v1591 = vmul.f32 %v1586, %v1590
      %v1594 = vunpack.c.l.s4 1966171168
      %v1595 = vunpack.c.0.s8 %v1594
      %v1596 = vlaneseq
      %v1597 = vshrl.u32 %v1596, 7
      %v1598 = vsub.s32 %v1595, %v1597
      %v1599 = vrot.slane %v1591, %v1598
      %v1600 = vcombine.high %v1599, %v1599
      %v1602 = vunpack.c.l.s4 1966171168
      %v1603 = vunpack.c.0.s8 %v1602
      %v1604 = vlaneseq
      %v1605 = vshrl.u32 %v1604, 7
      %v1606 = vsub.s32 %v1603, %v1605
      %v1607 = vrot.slane %v1599, %v1606
      %v1609 = vunpack.c.l.s4 1966171168
      %v1610 = vunpack.c.0.s8 %v1609
      %v1611 = vlaneseq
      %v1612 = vshrl.u32 %v1611, 7
      %v1613 = vsub.s32 %v1610, %v1612
      %v1614 = vrot.slane %v1600, %v1613
      %v1615 = vcombine.high %v1607, %v1607
      %v1616 = vcombine.high %v1614, %v1614
      %v1617 = vlaneseq
      %v1618 = vshrl.u32 %v1617, 7
      %v1619 = vsub.s32 0, %v1618
      %v1620 = vrot.slane %v1607, %v1619
      %v1621 = vlaneseq
      %v1622 = vshrl.u32 %v1621, 7
      %v1623 = vsub.s32 0, %v1622
      %v1624 = vrot.slane %v1614, %v1623
      %v1625 = vlaneseq
      %v1626 = vshrl.u32 %v1625, 7
      %v1627 = vsub.s32 0, %v1626
      %v1628 = vrot.slane %v1615, %v1627
      %v1629 = vlaneseq
      %v1630 = vshrl.u32 %v1629, 7
      %v1631 = vsub.s32 0, %v1630
      %v1632 = vrot.slane %v1616, %v1631
      %v1637 = vmul.f32 %v228, %v1620
      %v1638 = vmul.f32 %v229, %v1624
      %v1639 = vmul.f32 %v230, %v1628
      %v1640 = vmul.f32 %v231, %v1632
      %v1641 = vsel %vm232, %v1637, 0.0
      %1642 = vadd.xlane.f32.xlu0 %v1641
      %v1643 = vpop.xlane.xlu0 %1642
      %v1644 = vsel %vm232, %v1638, 0.0
      %1645 = vadd.xlane.f32.xlu0 %v1644
      %v1646 = vpop.xlane.xlu0 %1645
      %v1647 = vsel %vm232, %v1639, 0.0
      %1648 = vadd.xlane.f32.xlu0 %v1647
      %v1649 = vpop.xlane.xlu0 %1648
      %v1650 = vsel %vm232, %v1640, 0.0
      %1651 = vadd.xlane.f32.xlu0 %v1650
      %v1652 = vpop.xlane.xlu0 %1651
      %v1653 = vsub.f32 %v228, %v1643
      %v1654 = vsub.f32 %v229, %v1646
      %v1655 = vsub.f32 %v230, %v1649
      %v1656 = vsub.f32 %v231, %v1652
      %1657 = vst [vmem:[%s226] sm:$0x7] %v1653
      %1658 = vst [vmem:[%s226 + $0x4] sm:$0x7] %v1654
      %1659 = vst [vmem:[%s226 + $0x8] sm:$0x7] %v1655
      %1660 = vst [vmem:[%s226 + $0xc] sm:$0x7] %v1656
      %s1661 = smul.u32 4, %s16
      %p1662 = scmp.lt.s32.totalorder %s1661, 7
      %s1663 = scalar_select %p1662, %s1661, 7
      %s1664 = smul.addr %s1663, 4
      %s1665 = scalar_lea.vmem %s5, %s1664
      // Predicated region
      $region41: #{tpu_custom_call.1} parent=39 // pred_check
        %p1666 = pneg %p144
      $region42: #{tpu_custom_call.1} parent=39 // pred_check_branch
        %1668 = sbr.rel (%p1666) target = $region44
      $region43: #{tpu_custom_call.1} parent=39 // pred_region
        %s1669 = smul.u32 4, %s16
      $region44: #{tpu_custom_call.1} parent=39 // pred_fallthru
        _
    $region40: #{tpu_custom_call.1} parent=5 // pred_fallthru
      _
    %p1670 = scmp.le.s32.totalorder 2, %s11
    // Predicated region
    $region45: #{tpu_custom_call.1} parent=5 // pred_check
      %p1671 = pneg %p1670
    $region46: #{tpu_custom_call.1} parent=5 // pred_check_branch
      %1673 = sbr.rel (%p1671) target = $region48
    $region47: #{tpu_custom_call.1} parent=5 // pred_region
      %s1674 = ssub.s32 %s11, 2
      // Predicated region
      $region49: #{tpu_custom_call.1} parent=47 // pred_check
        %p1675 = pneg %p150
      $region50: #{tpu_custom_call.1} parent=47 // pred_check_branch
        %1677 = sbr.rel (%p1675) target = $region52
      $region51: #{tpu_custom_call.1} parent=47 // pred_region
        %s1678 = smul.u32 4, %s17
        %p1679 = scmp.lt.s32.totalorder %s1678, 7
        %s1680 = scalar_select %p1679, %s1678, 7
        %s1681 = smul.addr %s1680, 4
        %s1682 = scalar_lea.vmem %s5, %s1681
      $region52: #{tpu_custom_call.1} parent=47 // pred_fallthru
        _
    $region48: #{tpu_custom_call.1} parent=5 // pred_fallthru
      _
  $region6: #{tpu_custom_call.1} parent=0 // loop_footer
    %s15 = sadd.s32 1, %s11
  $region7: #{tpu_custom_call.1} parent=0 // loop_footer_branch
    %10 = sbr.rel target = $region3
  $region8: #{tpu_custom_call.1} parent=0 // loop_exit
    _

</llo_original>
